<compile_context>
chip_gen: v6e
topology: v6e:2x2x1
jax: 0.10.0
libtpu: 0.0.40
codegen_flags: <defaults>
</compile_context>

<pallas_src>
import jax
import jax.numpy as jnp
from jax import lax
from jax.experimental import pallas as pl
from jax.experimental.pallas import tpu as pltpu


def _shift_lanes(v, off):
    """Cyclic shift along the last (lane) axis: result[:, q] == v[:, (q + off) % L].

    Implemented as two static lane slices + concat (== jnp.roll(v, -off, axis=1));
    wrap-around positions are always zeroed by the caller's border mask.
    """
    if off == 0:
        return v
    return jnp.concatenate([v[:, off:], v[:, :off]], axis=1)


def _make_kernel(h, w, cin, cmid, cout, bt, compute_dtype):
    hw = h * w

    def kernel(x_ref, w1_ref, w2_ref, o_ref):
        # x_ref : (Bt, Cin, HW)      NCHW input block, spatial flattened onto lanes
        # w1_ref: (Cmid, Cin)        1x1 conv weights (constant index_map -> VMEM resident)
        # w2_ref: (9*Cout, Cmid)     3x3 conv weights, taps stacked on M:
        #                            row (ky*3+kx)*Cout + co == W2_oihw[co, :, ky, kx]
        # o_ref : (Bt, Cout+Cin, HW) fused [conv2_out, x] channel concat
        w1 = w1_ref[...]
        w2 = w2_ref[...]

        # Border-validity masks for the 8 non-center taps (shared across the block).
        q = lax.broadcasted_iota(jnp.int32, (1, hw), 1)   # flat spatial index
        xcol = q % w                                      # column index
        masks = {}
        for t in range(9):
            if t == 4:
                continue
            ky, kx = divmod(t, 3)
            conds = []
            if ky == 0:
                conds.append(q >= w)              # needs row y-1 -> valid iff y >= 1
            if ky == 2:
                conds.append(q < (h - 1) * w)     # needs row y+1 -> valid iff y <= H-2
            if kx == 0:
                conds.append(xcol >= 1)           # needs col x-1
            if kx == 2:
                conds.append(xcol <= w - 2)       # needs col x+1
            m = conds[0]
            for c in conds[1:]:
                m = m & c
            masks[t] = m

        for b in range(bt):   # static unroll over the batch block
            xb = x_ref[b]                         # (Cin, HW)
            xrb = jnp.maximum(xb, 0)              # relu(x) feeding conv1

            # ---- 1x1 conv + relu (f32 accumulation) ----
            if cin <= 8:
                # Tiny contraction depth: VPU broadcast-FMAs, keep it off the MXU.
                w1f = w1.astype(jnp.float32)
                xrf = xrb.astype(jnp.float32)
                mid = w1f[:, 0:1] * xrf[0:1, :]
                for c in range(1, cin):
                    mid = mid + w1f[:, c:c + 1] * xrf[c:c + 1, :]
            else:
                mid = jnp.dot(w1, xrb, preferred_element_type=jnp.float32)
            mid = jnp.maximum(mid, 0.0).astype(compute_dtype)          # (Cmid, HW)

            # ---- 3x3 conv: ONE stacked MXU matmul + 8 lane-shifts / masked adds ----
            big = jnp.dot(w2, mid, preferred_element_type=jnp.float32)  # (9*Cout, HW) f32

            acc = big[4 * cout:5 * cout, :]       # center tap: no shift, no mask
            for t in range(9):
                if t == 4:
                    continue
                ky, kx = divmod(t, 3)
                off = (ky - 1) * w + (kx - 1)     # flat offset of this tap's source pixel
                shifted = _shift_lanes(big[t * cout:(t + 1) * cout, :], off)
                acc = acc + jnp.where(masks[t], shifted, 0.0)

            # ---- fused output: [conv2_out, x] along channels, lane-dense stores ----
            o_ref[b, 0:cout, :] = acc.astype(o_ref.dtype)
            o_ref[b, cout:cout + cin, :] = xb

    return kernel


def _pick_block_batch(n, cin, cmid, cout, hw, itemsize, budget_bytes=18 * 1024 * 1024):
    """Largest divisor of n (<=8) whose per-step VMEM footprint fits the budget."""
    ctot = cin + cout
    per_img = hw * (
        2 * cin * itemsize        # double-buffered input block
        + 2 * ctot * itemsize     # double-buffered output block
        + cmid * (4 + itemsize)   # mid (f32 accumulation + cast copy)
        + 9 * cout * 4            # stacked tap-matmul result (f32)
        + 3 * cout * 4            # acc + shift/mask temporaries (f32)
    )
    for cand in range(min(n, 8), 0, -1):
        if n % cand == 0 and cand * per_img <= budget_bytes:
            return cand
    return 1   # TODO(synk): spatial (row) tiling if even one image exceeds the budget


def bottleneck_forward(x_nchw, w1_oihw, w2_oihw):
    n, cin, h, w = x_nchw.shape
    cmid = w1_oihw.shape[0]       # 4 * growth_rate
    cout = w2_oihw.shape[0]       # growth_rate
    hw = h * w
    ctot = cout + cin
    dt = x_nchw.dtype             # compute / output dtype follows the input dtype

    # NCHW-native: just flatten spatial; no transposes anywhere.
    x_flat = x_nchw.reshape(n, cin, hw)
    w1 = w1_oihw[:, :, 0, 0].astype(dt)                                            # (Cmid, Cin)
    w2s = jnp.transpose(w2_oihw, (2, 3, 0, 1)).reshape(9 * cout, cmid).astype(dt)  # (9*Cout, Cmid)

    bt = _pick_block_batch(n, cin, cmid, cout, hw, jnp.dtype(dt).itemsize)
    kernel = _make_kernel(h, w, cin, cmid, cout, bt, dt)

    out_flat = pl.pallas_call(
        kernel,
        out_shape=jax.ShapeDtypeStruct((n, ctot, hw), dt),
        grid=(n // bt,),
        in_specs=[
            pl.BlockSpec((bt, cin, hw), lambda i: (i, 0, 0)),
            pl.BlockSpec((cmid, cin), lambda i: (0, 0)),        # weights stay VMEM resident
            pl.BlockSpec((9 * cout, cmid), lambda i: (0, 0)),
        ],
        out_specs=pl.BlockSpec((bt, ctot, hw), lambda i: (i, 0, 0)),
        compiler_params=pltpu.CompilerParams(
            dimension_semantics=("parallel",),
            vmem_limit_bytes=32 * 1024 * 1024,
        ),
    )(x_flat, w1, w2s)

    return out_flat.reshape(n, ctot, h, w)


def _reference(x, w1_oihw, w2_oihw):
    # Pure-JAX reference (XLA convolutions) for correctness checking.
    mid = jax.lax.conv_general_dilated(
        jnp.maximum(x, 0.0), w1_oihw, (1, 1), 'VALID',
        dimension_numbers=('NCHW', 'OIHW', 'NCHW'), precision='highest')
    out = jax.lax.conv_general_dilated(
        jnp.maximum(mid, 0.0), w2_oihw, (1, 1), [(1, 1), (1, 1)],
        dimension_numbers=('NCHW', 'OIHW', 'NCHW'), precision='highest')
    return jnp.concatenate([out, x], axis=1)


if __name__ == "__main__":
    def _run_case(name, n, in_planes, growth, h, w, tag):
        cmid = 4 * growth
        key = jax.random.fold_in(jax.random.PRNGKey(0), tag)
        kx, k1, k2 = jax.random.split(key, 3)
        x = jax.random.normal(kx, (n, in_planes, h, w), dtype=jnp.float32)
        # Deterministic synthetic weights (shapes from nn.Conv2d in __init__), OIHW.
        w1 = 0.1 * jax.random.normal(k1, (cmid, in_planes, 1, 1), dtype=jnp.float32)
        w2 = 0.1 * jax.random.normal(k2, (growth, cmid, 3, 3), dtype=jnp.float32)
        # NOTE: bn1 / bn2 exist in the PyTorch __init__ but are never used in forward.
        out = jax.block_until_ready(jax.jit(bottleneck_forward)(x, w1, w2))
        ref = jax.block_until_ready(_reference(x, w1, w2))
        assert out.shape == (n, growth + in_planes, h, w), (name, out.shape)
        err = float(jnp.max(jnp.abs(out - ref)))
        assert jnp.allclose(out, ref, atol=1e-4, rtol=1e-4), (name, err)

    # Case 1: the spec's example shape (in_planes=4 -> tiny-K VPU path for the 1x1 conv).
    _run_case("vpu_1x1", n=2, in_planes=4, growth=8, h=16, w=16, tag=0)
    # Case 2: wider in_planes -> MXU path for the 1x1 conv + multi-image batch block.
    _run_case("mxu_1x1", n=4, in_planes=32, growth=8, h=16, w=16, tag=1)

    print("KERNEL_OK")
</pallas_src>

<mosaic_0001>
module attributes {stable_mosaic.version = 11 : i64} {
  func.func @kernel(%arg0: i32, %arg1: memref<2x4x256xf32, #tpu.memory_space<vmem>>, %arg2: memref<32x4xf32, #tpu.memory_space<vmem>>, %arg3: memref<72x32xf32, #tpu.memory_space<vmem>>, %arg4: memref<2x12x256xf32, #tpu.memory_space<vmem>>) attributes {dimension_semantics = [#tpu.dimension_semantics<parallel>], iteration_bounds = array<i64: 1>, scalar_prefetch = 0 : i64, scratch_operands = 0 : i64, tpu.core_type = #tpu.core_type<tc>, window_params = [{transform_indices = @transform_0, window_bounds = array<i64: 2, 4, 256>}, {pipeline_mode = #tpu.pipeline_mode<synchronous>, transform_indices = @transform_1, window_bounds = array<i64: 32, 4>}, {pipeline_mode = #tpu.pipeline_mode<synchronous>, transform_indices = @transform_2, window_bounds = array<i64: 72, 32>}, {transform_indices = @transform_3, window_bounds = array<i64: 2, 12, 256>}]} {
    %c0 = arith.constant 0 : index
    %c0_0 = arith.constant 0 : index
    %0 = vector.load %arg2[%c0, %c0_0] : memref<32x4xf32, #tpu.memory_space<vmem>>, vector<32x4xf32>
    %c0_1 = arith.constant 0 : index
    %c0_2 = arith.constant 0 : index
    %1 = vector.load %arg3[%c0_1, %c0_2] : memref<72x32xf32, #tpu.memory_space<vmem>>, vector<72x32xf32>
    %2 = tpu.iota {dimensions = array<i32: 1>} : vector<1x256xi32>
    %c16_i32 = arith.constant 16 : i32
    %c0_i32 = arith.constant 0 : i32
    %3 = arith.cmpi eq, %c16_i32, %c0_i32 : i32
    %c1_i32 = arith.constant 1 : i32
    %4 = arith.select %3, %c1_i32, %c16_i32 : i32
    %5 = vector.broadcast %4 : i32 to vector<1x256xi32>
    %6 = arith.remsi %2, %5 : vector<1x256xi32>
    %c0_i32_3 = arith.constant 0 : i32
    %7 = vector.broadcast %c0_i32_3 : i32 to vector<1x256xi32>
    %8 = arith.cmpi ne, %6, %7 : vector<1x256xi32>
    %c0_i32_4 = arith.constant 0 : i32
    %9 = vector.broadcast %c0_i32_4 : i32 to vector<1x256xi32>
    %10 = arith.cmpi slt, %6, %9 : vector<1x256xi32>
    %c0_i32_5 = arith.constant 0 : i32
    %11 = arith.cmpi slt, %4, %c0_i32_5 : i32
    %12 = vector.broadcast %11 : i1 to vector<1x256xi1>
    %13 = vector.broadcast %12 : vector<1x256xi1> to vector<1x256xi1>
    %14 = arith.xori %10, %13 : vector<1x256xi1>
    %15 = arith.andi %14, %8 : vector<1x256xi1>
    %16 = vector.broadcast %4 : i32 to vector<1x256xi32>
    %17 = arith.addi %6, %16 : vector<1x256xi32>
    %18 = arith.select %15, %17, %6 : vector<1x256xi1>, vector<1x256xi32>
    %c16_i32_6 = arith.constant 16 : i32
    %19 = vector.broadcast %c16_i32_6 : i32 to vector<1x256xi32>
    %20 = arith.cmpi sge, %2, %19 : vector<1x256xi32>
    %c1_i32_7 = arith.constant 1 : i32
    %21 = vector.broadcast %c1_i32_7 : i32 to vector<1x256xi32>
    %22 = arith.cmpi sge, %18, %21 : vector<1x256xi32>
    %23 = arith.andi %20, %22 : vector<1x256xi1>
    %c16_i32_8 = arith.constant 16 : i32
    %24 = vector.broadcast %c16_i32_8 : i32 to vector<1x256xi32>
    %25 = arith.cmpi sge, %2, %24 : vector<1x256xi32>
    %c16_i32_9 = arith.constant 16 : i32
    %26 = vector.broadcast %c16_i32_9 : i32 to vector<1x256xi32>
    %27 = arith.cmpi sge, %2, %26 : vector<1x256xi32>
    %c14_i32 = arith.constant 14 : i32
    %28 = vector.broadcast %c14_i32 : i32 to vector<1x256xi32>
    %29 = arith.cmpi sle, %18, %28 : vector<1x256xi32>
    %30 = arith.andi %27, %29 : vector<1x256xi1>
    %c1_i32_10 = arith.constant 1 : i32
    %31 = vector.broadcast %c1_i32_10 : i32 to vector<1x256xi32>
    %32 = arith.cmpi sge, %18, %31 : vector<1x256xi32>
    %c14_i32_11 = arith.constant 14 : i32
    %33 = vector.broadcast %c14_i32_11 : i32 to vector<1x256xi32>
    %34 = arith.cmpi sle, %18, %33 : vector<1x256xi32>
    %c240_i32 = arith.constant 240 : i32
    %35 = vector.broadcast %c240_i32 : i32 to vector<1x256xi32>
    %36 = arith.cmpi slt, %2, %35 : vector<1x256xi32>
    %c1_i32_12 = arith.constant 1 : i32
    %37 = vector.broadcast %c1_i32_12 : i32 to vector<1x256xi32>
    %38 = arith.cmpi sge, %18, %37 : vector<1x256xi32>
    %39 = arith.andi %36, %38 : vector<1x256xi1>
    %c240_i32_13 = arith.constant 240 : i32
    %40 = vector.broadcast %c240_i32_13 : i32 to vector<1x256xi32>
    %41 = arith.cmpi slt, %2, %40 : vector<1x256xi32>
    %c240_i32_14 = arith.constant 240 : i32
    %42 = vector.broadcast %c240_i32_14 : i32 to vector<1x256xi32>
    %43 = arith.cmpi slt, %2, %42 : vector<1x256xi32>
    %c14_i32_15 = arith.constant 14 : i32
    %44 = vector.broadcast %c14_i32_15 : i32 to vector<1x256xi32>
    %45 = arith.cmpi sle, %18, %44 : vector<1x256xi32>
    %46 = arith.andi %43, %45 : vector<1x256xi1>
    %c0_16 = arith.constant 0 : index
    %c0_17 = arith.constant 0 : index
    %c0_18 = arith.constant 0 : index
    %47 = vector.load %arg1[%c0_16, %c0_17, %c0_18] : memref<2x4x256xf32, #tpu.memory_space<vmem>>, vector<1x4x256xf32>
    %48 = vector.shape_cast %47 : vector<1x4x256xf32> to vector<4x256xf32>
    %cst = arith.constant 0.000000e+00 : f32
    %49 = vector.broadcast %cst : f32 to vector<4x256xf32>
    %50 = arith.maximumf %48, %49 : vector<4x256xf32>
    %51 = vector.extract_strided_slice %0 {offsets = [0, 0], sizes = [32, 1], strides = [1, 1]} : vector<32x4xf32> to vector<32x1xf32>
    %52 = vector.extract_strided_slice %50 {offsets = [0, 0], sizes = [1, 256], strides = [1, 1]} : vector<4x256xf32> to vector<1x256xf32>
    %53 = vector.broadcast %51 : vector<32x1xf32> to vector<32x256xf32>
    %54 = vector.broadcast %52 : vector<1x256xf32> to vector<32x256xf32>
    %55 = arith.mulf %53, %54 : vector<32x256xf32>
    %56 = vector.extract_strided_slice %0 {offsets = [0, 1], sizes = [32, 1], strides = [1, 1]} : vector<32x4xf32> to vector<32x1xf32>
    %57 = vector.extract_strided_slice %50 {offsets = [1, 0], sizes = [1, 256], strides = [1, 1]} : vector<4x256xf32> to vector<1x256xf32>
    %58 = vector.broadcast %56 : vector<32x1xf32> to vector<32x256xf32>
    %59 = vector.broadcast %57 : vector<1x256xf32> to vector<32x256xf32>
    %60 = arith.mulf %58, %59 : vector<32x256xf32>
    %61 = arith.addf %55, %60 : vector<32x256xf32>
    %62 = vector.extract_strided_slice %0 {offsets = [0, 2], sizes = [32, 1], strides = [1, 1]} : vector<32x4xf32> to vector<32x1xf32>
    %63 = vector.extract_strided_slice %50 {offsets = [2, 0], sizes = [1, 256], strides = [1, 1]} : vector<4x256xf32> to vector<1x256xf32>
    %64 = vector.broadcast %62 : vector<32x1xf32> to vector<32x256xf32>
    %65 = vector.broadcast %63 : vector<1x256xf32> to vector<32x256xf32>
    %66 = arith.mulf %64, %65 : vector<32x256xf32>
    %67 = arith.addf %61, %66 : vector<32x256xf32>
    %68 = vector.extract_strided_slice %0 {offsets = [0, 3], sizes = [32, 1], strides = [1, 1]} : vector<32x4xf32> to vector<32x1xf32>
    %69 = vector.extract_strided_slice %50 {offsets = [3, 0], sizes = [1, 256], strides = [1, 1]} : vector<4x256xf32> to vector<1x256xf32>
    %70 = vector.broadcast %68 : vector<32x1xf32> to vector<32x256xf32>
    %71 = vector.broadcast %69 : vector<1x256xf32> to vector<32x256xf32>
    %72 = arith.mulf %70, %71 : vector<32x256xf32>
    %73 = arith.addf %67, %72 : vector<32x256xf32>
    %cst_19 = arith.constant 0.000000e+00 : f32
    %74 = vector.broadcast %cst_19 : f32 to vector<32x256xf32>
    %75 = arith.maximumf %73, %74 : vector<32x256xf32>
    %cst_20 = arith.constant dense<0.000000e+00> : vector<72x256xf32>
    %76 = tpu.matmul %1, %75, %cst_20 {dimension_numbers = #tpu.dot_dimension_numbers<[1], [0], [0], [1], [0, 0, 1, 1], [], []>} : vector<72x32xf32>, vector<32x256xf32>, vector<72x256xf32> -> vector<72x256xf32>
    %77 = vector.extract_strided_slice %76 {offsets = [32, 0], sizes = [8, 256], strides = [1, 1]} : vector<72x256xf32> to vector<8x256xf32>
    %78 = vector.extract_strided_slice %76 {offsets = [0, 0], sizes = [8, 256], strides = [1, 1]} : vector<72x256xf32> to vector<8x256xf32>
    %79 = vector.extract_strided_slice %78 {offsets = [0, 239], sizes = [8, 17], strides = [1, 1]} : vector<8x256xf32> to vector<8x17xf32>
    %80 = vector.extract_strided_slice %78 {offsets = [0, 0], sizes = [8, 239], strides = [1, 1]} : vector<8x256xf32> to vector<8x239xf32>
    %81 = tpu.concatenate %79, %80 in 1 : vector<8x17xf32>, vector<8x239xf32> -> vector<8x256xf32>
    %cst_21 = arith.constant 0.000000e+00 : f32
    %82 = vector.shape_cast %23 : vector<1x256xi1> to vector<1x256xi1>
    %83 = vector.broadcast %82 : vector<1x256xi1> to vector<8x256xi1>
    %84 = vector.broadcast %cst_21 : f32 to vector<8x256xf32>
    %85 = arith.select %83, %81, %84 : vector<8x256xi1>, vector<8x256xf32>
    %86 = arith.addf %77, %85 : vector<8x256xf32>
    %87 = vector.extract_strided_slice %76 {offsets = [8, 0], sizes = [8, 256], strides = [1, 1]} : vector<72x256xf32> to vector<8x256xf32>
    %88 = vector.extract_strided_slice %87 {offsets = [0, 240], sizes = [8, 16], strides = [1, 1]} : vector<8x256xf32> to vector<8x16xf32>
    %89 = vector.extract_strided_slice %87 {offsets = [0, 0], sizes = [8, 240], strides = [1, 1]} : vector<8x256xf32> to vector<8x240xf32>
    %90 = tpu.concatenate %88, %89 in 1 : vector<8x16xf32>, vector<8x240xf32> -> vector<8x256xf32>
    %cst_22 = arith.constant 0.000000e+00 : f32
    %91 = vector.shape_cast %25 : vector<1x256xi1> to vector<1x256xi1>
    %92 = vector.broadcast %91 : vector<1x256xi1> to vector<8x256xi1>
    %93 = vector.broadcast %cst_22 : f32 to vector<8x256xf32>
    %94 = arith.select %92, %90, %93 : vector<8x256xi1>, vector<8x256xf32>
    %95 = arith.addf %86, %94 : vector<8x256xf32>
    %96 = vector.extract_strided_slice %76 {offsets = [16, 0], sizes = [8, 256], strides = [1, 1]} : vector<72x256xf32> to vector<8x256xf32>
    %97 = vector.extract_strided_slice %96 {offsets = [0, 241], sizes = [8, 15], strides = [1, 1]} : vector<8x256xf32> to vector<8x15xf32>
    %98 = vector.extract_strided_slice %96 {offsets = [0, 0], sizes = [8, 241], strides = [1, 1]} : vector<8x256xf32> to vector<8x241xf32>
    %99 = tpu.concatenate %97, %98 in 1 : vector<8x15xf32>, vector<8x241xf32> -> vector<8x256xf32>
    %cst_23 = arith.constant 0.000000e+00 : f32
    %100 = vector.shape_cast %30 : vector<1x256xi1> to vector<1x256xi1>
    %101 = vector.broadcast %100 : vector<1x256xi1> to vector<8x256xi1>
    %102 = vector.broadcast %cst_23 : f32 to vector<8x256xf32>
    %103 = arith.select %101, %99, %102 : vector<8x256xi1>, vector<8x256xf32>
    %104 = arith.addf %95, %103 : vector<8x256xf32>
    %105 = vector.extract_strided_slice %76 {offsets = [24, 0], sizes = [8, 256], strides = [1, 1]} : vector<72x256xf32> to vector<8x256xf32>
    %106 = vector.extract_strided_slice %105 {offsets = [0, 255], sizes = [8, 1], strides = [1, 1]} : vector<8x256xf32> to vector<8x1xf32>
    %107 = vector.extract_strided_slice %105 {offsets = [0, 0], sizes = [8, 255], strides = [1, 1]} : vector<8x256xf32> to vector<8x255xf32>
    %108 = tpu.concatenate %106, %107 in 1 : vector<8x1xf32>, vector<8x255xf32> -> vector<8x256xf32>
    %cst_24 = arith.constant 0.000000e+00 : f32
    %109 = vector.shape_cast %32 : vector<1x256xi1> to vector<1x256xi1>
    %110 = vector.broadcast %109 : vector<1x256xi1> to vector<8x256xi1>
    %111 = vector.broadcast %cst_24 : f32 to vector<8x256xf32>
    %112 = arith.select %110, %108, %111 : vector<8x256xi1>, vector<8x256xf32>
    %113 = arith.addf %104, %112 : vector<8x256xf32>
    %114 = vector.extract_strided_slice %76 {offsets = [40, 0], sizes = [8, 256], strides = [1, 1]} : vector<72x256xf32> to vector<8x256xf32>
    %115 = vector.extract_strided_slice %114 {offsets = [0, 1], sizes = [8, 255], strides = [1, 1]} : vector<8x256xf32> to vector<8x255xf32>
    %116 = vector.extract_strided_slice %114 {offsets = [0, 0], sizes = [8, 1], strides = [1, 1]} : vector<8x256xf32> to vector<8x1xf32>
    %117 = tpu.concatenate %115, %116 in 1 : vector<8x255xf32>, vector<8x1xf32> -> vector<8x256xf32>
    %cst_25 = arith.constant 0.000000e+00 : f32
    %118 = vector.shape_cast %34 : vector<1x256xi1> to vector<1x256xi1>
    %119 = vector.broadcast %118 : vector<1x256xi1> to vector<8x256xi1>
    %120 = vector.broadcast %cst_25 : f32 to vector<8x256xf32>
    %121 = arith.select %119, %117, %120 : vector<8x256xi1>, vector<8x256xf32>
    %122 = arith.addf %113, %121 : vector<8x256xf32>
    %123 = vector.extract_strided_slice %76 {offsets = [48, 0], sizes = [8, 256], strides = [1, 1]} : vector<72x256xf32> to vector<8x256xf32>
    %124 = vector.extract_strided_slice %123 {offsets = [0, 15], sizes = [8, 241], strides = [1, 1]} : vector<8x256xf32> to vector<8x241xf32>
    %125 = vector.extract_strided_slice %123 {offsets = [0, 0], sizes = [8, 15], strides = [1, 1]} : vector<8x256xf32> to vector<8x15xf32>
    %126 = tpu.concatenate %124, %125 in 1 : vector<8x241xf32>, vector<8x15xf32> -> vector<8x256xf32>
    %cst_26 = arith.constant 0.000000e+00 : f32
    %127 = vector.shape_cast %39 : vector<1x256xi1> to vector<1x256xi1>
    %128 = vector.broadcast %127 : vector<1x256xi1> to vector<8x256xi1>
    %129 = vector.broadcast %cst_26 : f32 to vector<8x256xf32>
    %130 = arith.select %128, %126, %129 : vector<8x256xi1>, vector<8x256xf32>
    %131 = arith.addf %122, %130 : vector<8x256xf32>
    %132 = vector.extract_strided_slice %76 {offsets = [56, 0], sizes = [8, 256], strides = [1, 1]} : vector<72x256xf32> to vector<8x256xf32>
    %133 = vector.extract_strided_slice %132 {offsets = [0, 16], sizes = [8, 240], strides = [1, 1]} : vector<8x256xf32> to vector<8x240xf32>
    %134 = vector.extract_strided_slice %132 {offsets = [0, 0], sizes = [8, 16], strides = [1, 1]} : vector<8x256xf32> to vector<8x16xf32>
    %135 = tpu.concatenate %133, %134 in 1 : vector<8x240xf32>, vector<8x16xf32> -> vector<8x256xf32>
    %cst_27 = arith.constant 0.000000e+00 : f32
    %136 = vector.shape_cast %41 : vector<1x256xi1> to vector<1x256xi1>
    %137 = vector.broadcast %136 : vector<1x256xi1> to vector<8x256xi1>
    %138 = vector.broadcast %cst_27 : f32 to vector<8x256xf32>
    %139 = arith.select %137, %135, %138 : vector<8x256xi1>, vector<8x256xf32>
    %140 = arith.addf %131, %139 : vector<8x256xf32>
    %141 = vector.extract_strided_slice %76 {offsets = [64, 0], sizes = [8, 256], strides = [1, 1]} : vector<72x256xf32> to vector<8x256xf32>
    %142 = vector.extract_strided_slice %141 {offsets = [0, 17], sizes = [8, 239], strides = [1, 1]} : vector<8x256xf32> to vector<8x239xf32>
    %143 = vector.extract_strided_slice %141 {offsets = [0, 0], sizes = [8, 17], strides = [1, 1]} : vector<8x256xf32> to vector<8x17xf32>
    %144 = tpu.concatenate %142, %143 in 1 : vector<8x239xf32>, vector<8x17xf32> -> vector<8x256xf32>
    %cst_28 = arith.constant 0.000000e+00 : f32
    %145 = vector.shape_cast %46 : vector<1x256xi1> to vector<1x256xi1>
    %146 = vector.broadcast %145 : vector<1x256xi1> to vector<8x256xi1>
    %147 = vector.broadcast %cst_28 : f32 to vector<8x256xf32>
    %148 = arith.select %146, %144, %147 : vector<8x256xi1>, vector<8x256xf32>
    %149 = arith.addf %140, %148 : vector<8x256xf32>
    %c0_29 = arith.constant 0 : index
    %c0_30 = arith.constant 0 : index
    %c0_31 = arith.constant 0 : index
    %150 = vector.load %arg4[%c0_29, %c0_30, %c0_31] : memref<2x12x256xf32, #tpu.memory_space<vmem>>, vector<1x8x256xf32>
    %151 = vector.shape_cast %150 : vector<1x8x256xf32> to vector<8x256xf32>
    %152 = vector.shape_cast %149 : vector<8x256xf32> to vector<1x8x256xf32>
    tpu.vector_store %arg4[%c0_29, %c0_30, %c0_31], %152 {strides = array<i32>} : memref<2x12x256xf32, #tpu.memory_space<vmem>>, vector<1x8x256xf32>,
    %c0_32 = arith.constant 0 : index
    %c8 = arith.constant 8 : index
    %c0_33 = arith.constant 0 : index
    %153 = vector.load %arg4[%c0_32, %c8, %c0_33] : memref<2x12x256xf32, #tpu.memory_space<vmem>>, vector<1x4x256xf32>
    %154 = vector.shape_cast %153 : vector<1x4x256xf32> to vector<4x256xf32>
    %155 = vector.shape_cast %48 : vector<4x256xf32> to vector<1x4x256xf32>
    tpu.vector_store %arg4[%c0_32, %c8, %c0_33], %155 {strides = array<i32>} : memref<2x12x256xf32, #tpu.memory_space<vmem>>, vector<1x4x256xf32>,
    %c1 = arith.constant 1 : index
    %c0_34 = arith.constant 0 : index
    %c0_35 = arith.constant 0 : index
    %156 = vector.load %arg1[%c1, %c0_34, %c0_35] : memref<2x4x256xf32, #tpu.memory_space<vmem>>, vector<1x4x256xf32>
    %157 = vector.shape_cast %156 : vector<1x4x256xf32> to vector<4x256xf32>
    %cst_36 = arith.constant 0.000000e+00 : f32
    %158 = vector.broadcast %cst_36 : f32 to vector<4x256xf32>
    %159 = arith.maximumf %157, %158 : vector<4x256xf32>
    %160 = vector.extract_strided_slice %0 {offsets = [0, 0], sizes = [32, 1], strides = [1, 1]} : vector<32x4xf32> to vector<32x1xf32>
    %161 = vector.extract_strided_slice %159 {offsets = [0, 0], sizes = [1, 256], strides = [1, 1]} : vector<4x256xf32> to vector<1x256xf32>
    %162 = vector.broadcast %160 : vector<32x1xf32> to vector<32x256xf32>
    %163 = vector.broadcast %161 : vector<1x256xf32> to vector<32x256xf32>
    %164 = arith.mulf %162, %163 : vector<32x256xf32>
    %165 = vector.extract_strided_slice %0 {offsets = [0, 1], sizes = [32, 1], strides = [1, 1]} : vector<32x4xf32> to vector<32x1xf32>
    %166 = vector.extract_strided_slice %159 {offsets = [1, 0], sizes = [1, 256], strides = [1, 1]} : vector<4x256xf32> to vector<1x256xf32>
    %167 = vector.broadcast %165 : vector<32x1xf32> to vector<32x256xf32>
    %168 = vector.broadcast %166 : vector<1x256xf32> to vector<32x256xf32>
    %169 = arith.mulf %167, %168 : vector<32x256xf32>
    %170 = arith.addf %164, %169 : vector<32x256xf32>
    %171 = vector.extract_strided_slice %0 {offsets = [0, 2], sizes = [32, 1], strides = [1, 1]} : vector<32x4xf32> to vector<32x1xf32>
    %172 = vector.extract_strided_slice %159 {offsets = [2, 0], sizes = [1, 256], strides = [1, 1]} : vector<4x256xf32> to vector<1x256xf32>
    %173 = vector.broadcast %171 : vector<32x1xf32> to vector<32x256xf32>
    %174 = vector.broadcast %172 : vector<1x256xf32> to vector<32x256xf32>
    %175 = arith.mulf %173, %174 : vector<32x256xf32>
    %176 = arith.addf %170, %175 : vector<32x256xf32>
    %177 = vector.extract_strided_slice %0 {offsets = [0, 3], sizes = [32, 1], strides = [1, 1]} : vector<32x4xf32> to vector<32x1xf32>
    %178 = vector.extract_strided_slice %159 {offsets = [3, 0], sizes = [1, 256], strides = [1, 1]} : vector<4x256xf32> to vector<1x256xf32>
    %179 = vector.broadcast %177 : vector<32x1xf32> to vector<32x256xf32>
    %180 = vector.broadcast %178 : vector<1x256xf32> to vector<32x256xf32>
    %181 = arith.mulf %179, %180 : vector<32x256xf32>
    %182 = arith.addf %176, %181 : vector<32x256xf32>
    %cst_37 = arith.constant 0.000000e+00 : f32
    %183 = vector.broadcast %cst_37 : f32 to vector<32x256xf32>
    %184 = arith.maximumf %182, %183 : vector<32x256xf32>
    %cst_38 = arith.constant dense<0.000000e+00> : vector<72x256xf32>
    %185 = tpu.matmul %1, %184, %cst_38 {dimension_numbers = #tpu.dot_dimension_numbers<[1], [0], [0], [1], [0, 0, 1, 1], [], []>} : vector<72x32xf32>, vector<32x256xf32>, vector<72x256xf32> -> vector<72x256xf32>
    %186 = vector.extract_strided_slice %185 {offsets = [32, 0], sizes = [8, 256], strides = [1, 1]} : vector<72x256xf32> to vector<8x256xf32>
    %187 = vector.extract_strided_slice %185 {offsets = [0, 0], sizes = [8, 256], strides = [1, 1]} : vector<72x256xf32> to vector<8x256xf32>
    %188 = vector.extract_strided_slice %187 {offsets = [0, 239], sizes = [8, 17], strides = [1, 1]} : vector<8x256xf32> to vector<8x17xf32>
    %189 = vector.extract_strided_slice %187 {offsets = [0, 0], sizes = [8, 239], strides = [1, 1]} : vector<8x256xf32> to vector<8x239xf32>
    %190 = tpu.concatenate %188, %189 in 1 : vector<8x17xf32>, vector<8x239xf32> -> vector<8x256xf32>
    %cst_39 = arith.constant 0.000000e+00 : f32
    %191 = vector.shape_cast %23 : vector<1x256xi1> to vector<1x256xi1>
    %192 = vector.broadcast %191 : vector<1x256xi1> to vector<8x256xi1>
    %193 = vector.broadcast %cst_39 : f32 to vector<8x256xf32>
    %194 = arith.select %192, %190, %193 : vector<8x256xi1>, vector<8x256xf32>
    %195 = arith.addf %186, %194 : vector<8x256xf32>
    %196 = vector.extract_strided_slice %185 {offsets = [8, 0], sizes = [8, 256], strides = [1, 1]} : vector<72x256xf32> to vector<8x256xf32>
    %197 = vector.extract_strided_slice %196 {offsets = [0, 240], sizes = [8, 16], strides = [1, 1]} : vector<8x256xf32> to vector<8x16xf32>
    %198 = vector.extract_strided_slice %196 {offsets = [0, 0], sizes = [8, 240], strides = [1, 1]} : vector<8x256xf32> to vector<8x240xf32>
    %199 = tpu.concatenate %197, %198 in 1 : vector<8x16xf32>, vector<8x240xf32> -> vector<8x256xf32>
    %cst_40 = arith.constant 0.000000e+00 : f32
    %200 = vector.shape_cast %25 : vector<1x256xi1> to vector<1x256xi1>
    %201 = vector.broadcast %200 : vector<1x256xi1> to vector<8x256xi1>
    %202 = vector.broadcast %cst_40 : f32 to vector<8x256xf32>
    %203 = arith.select %201, %199, %202 : vector<8x256xi1>, vector<8x256xf32>
    %204 = arith.addf %195, %203 : vector<8x256xf32>
    %205 = vector.extract_strided_slice %185 {offsets = [16, 0], sizes = [8, 256], strides = [1, 1]} : vector<72x256xf32> to vector<8x256xf32>
    %206 = vector.extract_strided_slice %205 {offsets = [0, 241], sizes = [8, 15], strides = [1, 1]} : vector<8x256xf32> to vector<8x15xf32>
    %207 = vector.extract_strided_slice %205 {offsets = [0, 0], sizes = [8, 241], strides = [1, 1]} : vector<8x256xf32> to vector<8x241xf32>
    %208 = tpu.concatenate %206, %207 in 1 : vector<8x15xf32>, vector<8x241xf32> -> vector<8x256xf32>
    %cst_41 = arith.constant 0.000000e+00 : f32
    %209 = vector.shape_cast %30 : vector<1x256xi1> to vector<1x256xi1>
    %210 = vector.broadcast %209 : vector<1x256xi1> to vector<8x256xi1>
    %211 = vector.broadcast %cst_41 : f32 to vector<8x256xf32>
    %212 = arith.select %210, %208, %211 : vector<8x256xi1>, vector<8x256xf32>
    %213 = arith.addf %204, %212 : vector<8x256xf32>
    %214 = vector.extract_strided_slice %185 {offsets = [24, 0], sizes = [8, 256], strides = [1, 1]} : vector<72x256xf32> to vector<8x256xf32>
    %215 = vector.extract_strided_slice %214 {offsets = [0, 255], sizes = [8, 1], strides = [1, 1]} : vector<8x256xf32> to vector<8x1xf32>
    %216 = vector.extract_strided_slice %214 {offsets = [0, 0], sizes = [8, 255], strides = [1, 1]} : vector<8x256xf32> to vector<8x255xf32>
    %217 = tpu.concatenate %215, %216 in 1 : vector<8x1xf32>, vector<8x255xf32> -> vector<8x256xf32>
    %cst_42 = arith.constant 0.000000e+00 : f32
    %218 = vector.shape_cast %32 : vector<1x256xi1> to vector<1x256xi1>
    %219 = vector.broadcast %218 : vector<1x256xi1> to vector<8x256xi1>
    %220 = vector.broadcast %cst_42 : f32 to vector<8x256xf32>
    %221 = arith.select %219, %217, %220 : vector<8x256xi1>, vector<8x256xf32>
    %222 = arith.addf %213, %221 : vector<8x256xf32>
    %223 = vector.extract_strided_slice %185 {offsets = [40, 0], sizes = [8, 256], strides = [1, 1]} : vector<72x256xf32> to vector<8x256xf32>
    %224 = vector.extract_strided_slice %223 {offsets = [0, 1], sizes = [8, 255], strides = [1, 1]} : vector<8x256xf32> to vector<8x255xf32>
    %225 = vector.extract_strided_slice %223 {offsets = [0, 0], sizes = [8, 1], strides = [1, 1]} : vector<8x256xf32> to vector<8x1xf32>
    %226 = tpu.concatenate %224, %225 in 1 : vector<8x255xf32>, vector<8x1xf32> -> vector<8x256xf32>
    %cst_43 = arith.constant 0.000000e+00 : f32
    %227 = vector.shape_cast %34 : vector<1x256xi1> to vector<1x256xi1>
    %228 = vector.broadcast %227 : vector<1x256xi1> to vector<8x256xi1>
    %229 = vector.broadcast %cst_43 : f32 to vector<8x256xf32>
    %230 = arith.select %228, %226, %229 : vector<8x256xi1>, vector<8x256xf32>
    %231 = arith.addf %222, %230 : vector<8x256xf32>
    %232 = vector.extract_strided_slice %185 {offsets = [48, 0], sizes = [8, 256], strides = [1, 1]} : vector<72x256xf32> to vector<8x256xf32>
    %233 = vector.extract_strided_slice %232 {offsets = [0, 15], sizes = [8, 241], strides = [1, 1]} : vector<8x256xf32> to vector<8x241xf32>
    %234 = vector.extract_strided_slice %232 {offsets = [0, 0], sizes = [8, 15], strides = [1, 1]} : vector<8x256xf32> to vector<8x15xf32>
    %235 = tpu.concatenate %233, %234 in 1 : vector<8x241xf32>, vector<8x15xf32> -> vector<8x256xf32>
    %cst_44 = arith.constant 0.000000e+00 : f32
    %236 = vector.shape_cast %39 : vector<1x256xi1> to vector<1x256xi1>
    %237 = vector.broadcast %236 : vector<1x256xi1> to vector<8x256xi1>
    %238 = vector.broadcast %cst_44 : f32 to vector<8x256xf32>
    %239 = arith.select %237, %235, %238 : vector<8x256xi1>, vector<8x256xf32>
    %240 = arith.addf %231, %239 : vector<8x256xf32>
    %241 = vector.extract_strided_slice %185 {offsets = [56, 0], sizes = [8, 256], strides = [1, 1]} : vector<72x256xf32> to vector<8x256xf32>
    %242 = vector.extract_strided_slice %241 {offsets = [0, 16], sizes = [8, 240], strides = [1, 1]} : vector<8x256xf32> to vector<8x240xf32>
    %243 = vector.extract_strided_slice %241 {offsets = [0, 0], sizes = [8, 16], strides = [1, 1]} : vector<8x256xf32> to vector<8x16xf32>
    %244 = tpu.concatenate %242, %243 in 1 : vector<8x240xf32>, vector<8x16xf32> -> vector<8x256xf32>
    %cst_45 = arith.constant 0.000000e+00 : f32
    %245 = vector.shape_cast %41 : vector<1x256xi1> to vector<1x256xi1>
    %246 = vector.broadcast %245 : vector<1x256xi1> to vector<8x256xi1>
    %247 = vector.broadcast %cst_45 : f32 to vector<8x256xf32>
    %248 = arith.select %246, %244, %247 : vector<8x256xi1>, vector<8x256xf32>
    %249 = arith.addf %240, %248 : vector<8x256xf32>
    %250 = vector.extract_strided_slice %185 {offsets = [64, 0], sizes = [8, 256], strides = [1, 1]} : vector<72x256xf32> to vector<8x256xf32>
    %251 = vector.extract_strided_slice %250 {offsets = [0, 17], sizes = [8, 239], strides = [1, 1]} : vector<8x256xf32> to vector<8x239xf32>
    %252 = vector.extract_strided_slice %250 {offsets = [0, 0], sizes = [8, 17], strides = [1, 1]} : vector<8x256xf32> to vector<8x17xf32>
    %253 = tpu.concatenate %251, %252 in 1 : vector<8x239xf32>, vector<8x17xf32> -> vector<8x256xf32>
    %cst_46 = arith.constant 0.000000e+00 : f32
    %254 = vector.shape_cast %46 : vector<1x256xi1> to vector<1x256xi1>
    %255 = vector.broadcast %254 : vector<1x256xi1> to vector<8x256xi1>
    %256 = vector.broadcast %cst_46 : f32 to vector<8x256xf32>
    %257 = arith.select %255, %253, %256 : vector<8x256xi1>, vector<8x256xf32>
    %258 = arith.addf %249, %257 : vector<8x256xf32>
    %c1_47 = arith.constant 1 : index
    %c0_48 = arith.constant 0 : index
    %c0_49 = arith.constant 0 : index
    %259 = vector.load %arg4[%c1_47, %c0_48, %c0_49] : memref<2x12x256xf32, #tpu.memory_space<vmem>>, vector<1x8x256xf32>
    %260 = vector.shape_cast %259 : vector<1x8x256xf32> to vector<8x256xf32>
    %261 = vector.shape_cast %258 : vector<8x256xf32> to vector<1x8x256xf32>
    tpu.vector_store %arg4[%c1_47, %c0_48, %c0_49], %261 {strides = array<i32>} : memref<2x12x256xf32, #tpu.memory_space<vmem>>, vector<1x8x256xf32>,
    %c1_50 = arith.constant 1 : index
    %c8_51 = arith.constant 8 : index
    %c0_52 = arith.constant 0 : index
    %262 = vector.load %arg4[%c1_50, %c8_51, %c0_52] : memref<2x12x256xf32, #tpu.memory_space<vmem>>, vector<1x4x256xf32>
    %263 = vector.shape_cast %262 : vector<1x4x256xf32> to vector<4x256xf32>
    %264 = vector.shape_cast %157 : vector<4x256xf32> to vector<1x4x256xf32>
    tpu.vector_store %arg4[%c1_50, %c8_51, %c0_52], %264 {strides = array<i32>} : memref<2x12x256xf32, #tpu.memory_space<vmem>>, vector<1x4x256xf32>,
    return
  }
  func.func @transform_0(%arg0: i32) -> (i32, i32, i32) {
    %c0_i32 = arith.constant 0 : i32
    %c0_i32_0 = arith.constant 0 : i32
    %c0_i32_1 = arith.constant 0 : i32
    return %arg0, %c0_i32, %c0_i32_0 : i32, i32, i32
  }
  func.func @transform_1(%arg0: i32) -> (i32, i32) {
    %c0_i32 = arith.constant 0 : i32
    %c0_i32_0 = arith.constant 0 : i32
    %c0_i32_1 = arith.constant 0 : i32
    return %c0_i32, %c0_i32_0 : i32, i32
  }
  func.func @transform_2(%arg0: i32) -> (i32, i32) {
    %c0_i32 = arith.constant 0 : i32
    %c0_i32_0 = arith.constant 0 : i32
    %c0_i32_1 = arith.constant 0 : i32
    return %c0_i32, %c0_i32_0 : i32, i32
  }
  func.func @transform_3(%arg0: i32) -> (i32, i32, i32) {
    %c0_i32 = arith.constant 0 : i32
    %c0_i32_0 = arith.constant 0 : i32
    %c0_i32_1 = arith.constant 0 : i32
    return %arg0, %c0_i32, %c0_i32_0 : i32, i32, i32
  }
}

</mosaic_0001>

<llo_original>
// kernel: bottleneck_forward.1
$region0: #{bottleneck_forward.1}
  #allocation0 [shape = 'u32[]', space=smem, size = 0x4, offset = 0x4, fixed_abs, tag = 'smem constant byte address 0x4 - core index']
  #allocation1 [shape = 'u32[144,128]{1,0:T(1,128)}', space=vmem, size = 0x12000, scoped, tag = 'internal scratch']
  %s0 = inlined_call_operand.vmem [shape: f32[2,4,256], index: 0, kind: input, shape index: {}]
  %s1 = inlined_call_operand.vmem [shape: f32[32,4], index: 1, kind: input, shape index: {}]
  %s2 = inlined_call_operand.vmem [shape: f32[72,32], index: 2, kind: input, shape index: {}]
  %s3 = inlined_call_operand.vmem [shape: f32[2,12,256], index: 3, kind: output, shape index: {}]
  %s4 = sld [smem:[#allocation0]]
  $region22: #{bottleneck_forward.1} parent=0
    _
  %s6 = ssub.s32 1, %s4
  %s7 = scalar_select 0, %s6, %s4
  // Predicated region
  $region2: #{bottleneck_forward.1} parent=0 // pred_check
    _
  $region3: #{bottleneck_forward.1} parent=0 // pred_check_branch
    %9 = sbr.rel (0) target = $region5
  $region4: #{bottleneck_forward.1} parent=0 // pred_region
    _
  $region5: #{bottleneck_forward.1} parent=0 // pred_fallthru
    _
  // Predicated region
  $region6: #{bottleneck_forward.1} parent=0 // pred_check
    _
  $region7: #{bottleneck_forward.1} parent=0 // pred_check_branch
    %11 = sbr.rel (0) target = $region9
  $region8: #{bottleneck_forward.1} parent=0 // pred_region
    _
  $region9: #{bottleneck_forward.1} parent=0 // pred_fallthru
    _
  // Predicated region
  $region10: #{bottleneck_forward.1} parent=0 // pred_check
    _
  $region11: #{bottleneck_forward.1} parent=0 // pred_check_branch
    %13 = sbr.rel (0) target = $region13
  $region12: #{bottleneck_forward.1} parent=0 // pred_region
    _
  $region13: #{bottleneck_forward.1} parent=0 // pred_fallthru
    _
  %v14 = vld [vmem:[%s1] sm:$0xff]
  %v15 = vld [vmem:[%s1 + $0x8] sm:$0xff]
  %v16 = vld [vmem:[%s1 + $0x10] sm:$0xff]
  %v17 = vld [vmem:[%s1 + $0x18] sm:$0xff]
  %v18 = vld [vmem:[%s2] sm:$0xff]
  %v19 = vld [vmem:[%s2 + $0x8] sm:$0xff]
  %v20 = vld [vmem:[%s2 + $0x10] sm:$0xff]
  %v21 = vld [vmem:[%s2 + $0x18] sm:$0xff]
  %v22 = vld [vmem:[%s2 + $0x20] sm:$0xff]
  %v23 = vld [vmem:[%s2 + $0x28] sm:$0xff]
  %v24 = vld [vmem:[%s2 + $0x30] sm:$0xff]
  %v25 = vld [vmem:[%s2 + $0x38] sm:$0xff]
  %v26 = vld [vmem:[%s2 + $0x40] sm:$0xff]
  %v27 = vlaneseq
  %v28 = vand.u32 %v27, 127
  %v29 = vadd.s32 %v28, 128
  %vm30 = vcmp.lt.s32.totalorder %v28, 0
  %v31 = vsub.s32 0, %v28
  %v32 = vsel %vm30, %v31, %v28
  %v33 = vshrl.u32 %v32, 4
  %v34 = vand.u32 %v32, 15
  %v35 = vsub.s32 0, %v34
  %v36 = vsel %vm30, %v35, %v34
  %vm37 = vcmp.lt.s32.totalorder %v29, 0
  %v38 = vsub.s32 0, %v29
  %v39 = vsel %vm37, %v38, %v29
  %v40 = vshrl.u32 %v39, 4
  %v41 = vand.u32 %v39, 15
  %v42 = vsub.s32 0, %v41
  %v43 = vsel %vm37, %v42, %v41
  %vm44 = vcmp.ne.s32.totalorder %v36, 0
  %vm45 = vcmp.ne.s32.totalorder %v43, 0
  %vm46 = vcmp.lt.s32.totalorder %v36, 0
  %vm47 = vcmp.lt.s32.totalorder %v43, 0
  %vm48 = vmand %vm46, %vm44
  %vm49 = vmand %vm47, %vm45
  %v50 = vadd.s32 %v36, 16
  %v51 = vadd.s32 %v43, 16
  %v52 = vsel %vm48, %v50, %v36
  %v53 = vsel %vm49, %v51, %v43
  %vm54 = vcmp.ge.s32.totalorder %v28, 16
  %vm55 = vcmp.ge.s32.totalorder %v29, 16
  %vm56 = vcmp.ge.s32.totalorder %v52, 1
  %vm57 = vcmp.ge.s32.totalorder %v53, 1
  %vm58 = vmand %vm54, %vm56
  %vm59 = vmand %vm55, %vm57
  %vm60 = vcmp.le.s32.totalorder %v52, 14
  %vm61 = vcmp.le.s32.totalorder %v53, 14
  %vm62 = vmand %vm54, %vm60
  %vm63 = vmand %vm55, %vm61
  %vm64 = vcmp.lt.s32.totalorder %v28, 240
  %vm65 = vcmp.lt.s32.totalorder %v29, 240
  %vm66 = vmand %vm64, %vm56
  %vm67 = vmand %vm65, %vm57
  %vm68 = vmand %vm64, %vm60
  %vm69 = vmand %vm65, %vm61
  %v70 = vld [vmem:[%s0] sm:$0xff]
  %v71 = vmax.f32 %v70, 0.0
  %73 = vset.pattern.permute.xlu0 0
  %74 = vperm.xlu0 %73, %v14
  %v75 = vpop.permute.xlu0 %74
  %78 = vset.pattern.permute.xlu0 0
  %79 = vperm.xlu0 %78, %v15
  %v80 = vpop.permute.xlu0 %79
  %83 = vset.pattern.permute.xlu0 0
  %84 = vperm.xlu0 %83, %v16
  %v85 = vpop.permute.xlu0 %84
  %88 = vset.pattern.permute.xlu0 0
  %89 = vperm.xlu0 %88, %v17
  %v90 = vpop.permute.xlu0 %89
  %v93 = vlaneseq
  %v94 = vshrl.u32 %v93, 7
  %v95 = vsub.s32 0, %v94
  %v96 = vrot.slane %v71, %v95
  %v97 = vlaneseq
  %v98 = vshrl.u32 %v97, 7
  %v99 = vsub.s32 4, %v98
  %v100 = vrot.slane %v71, %v99
  %v103 = vlaneseq
  %v104 = vshrl.u32 %v103, 7
  %v105 = vsub.s32 0, %v104
  %v106 = vrot.slane %v96, %v105
  %v107 = vlaneseq
  %v108 = vshrl.u32 %v107, 7
  %v109 = vsub.s32 0, %v108
  %v110 = vrot.slane %v100, %v109
  %v111 = vmul.f32 %v75, %v106
  %v112 = vmul.f32 %v75, %v110
  %v113 = vmul.f32 %v80, %v106
  %v114 = vmul.f32 %v80, %v110
  %v115 = vmul.f32 %v85, %v106
  %v116 = vmul.f32 %v85, %v110
  %v117 = vmul.f32 %v90, %v106
  %v118 = vmul.f32 %v90, %v110
  %119 = vset.pattern.permute.xlu0 1
  %120 = vperm.xlu0 %119, %v14
  %v121 = vpop.permute.xlu0 %120
  %123 = vset.pattern.permute.xlu0 1
  %124 = vperm.xlu0 %123, %v15
  %v125 = vpop.permute.xlu0 %124
  %127 = vset.pattern.permute.xlu0 1
  %128 = vperm.xlu0 %127, %v16
  %v129 = vpop.permute.xlu0 %128
  %131 = vset.pattern.permute.xlu0 1
  %132 = vperm.xlu0 %131, %v17
  %v133 = vpop.permute.xlu0 %132
  %v135 = vlaneseq
  %v136 = vshrl.u32 %v135, 7
  %v137 = vsub.s32 1, %v136
  %v138 = vrot.slane %v71, %v137
  %v139 = vlaneseq
  %v140 = vshrl.u32 %v139, 7
  %v141 = vsub.s32 5, %v140
  %v142 = vrot.slane %v71, %v141
  %v145 = vlaneseq
  %v146 = vshrl.u32 %v145, 7
  %v147 = vsub.s32 1, %v146
  %v148 = vrot.slane %v138, %v147
  %v149 = vlaneseq
  %v150 = vshrl.u32 %v149, 7
  %v151 = vsub.s32 1, %v150
  %v152 = vrot.slane %v142, %v151
  %v153 = vmul.f32 %v121, %v148
  %v154 = vmul.f32 %v121, %v152
  %v155 = vmul.f32 %v125, %v148
  %v156 = vmul.f32 %v125, %v152
  %v157 = vmul.f32 %v129, %v148
  %v158 = vmul.f32 %v129, %v152
  %v159 = vmul.f32 %v133, %v148
  %v160 = vmul.f32 %v133, %v152
  %v161 = vadd.f32 %v111, %v153
  %v162 = vadd.f32 %v112, %v154
  %v163 = vadd.f32 %v113, %v155
  %v164 = vadd.f32 %v114, %v156
  %v165 = vadd.f32 %v115, %v157
  %v166 = vadd.f32 %v116, %v158
  %v167 = vadd.f32 %v117, %v159
  %v168 = vadd.f32 %v118, %v160
  %169 = vset.pattern.permute.xlu0 2
  %170 = vperm.xlu0 %169, %v14
  %v171 = vpop.permute.xlu0 %170
  %173 = vset.pattern.permute.xlu0 2
  %174 = vperm.xlu0 %173, %v15
  %v175 = vpop.permute.xlu0 %174
  %177 = vset.pattern.permute.xlu0 2
  %178 = vperm.xlu0 %177, %v16
  %v179 = vpop.permute.xlu0 %178
  %181 = vset.pattern.permute.xlu0 2
  %182 = vperm.xlu0 %181, %v17
  %v183 = vpop.permute.xlu0 %182
  %v185 = vlaneseq
  %v186 = vshrl.u32 %v185, 7
  %v187 = vsub.s32 2, %v186
  %v188 = vrot.slane %v71, %v187
  %v189 = vlaneseq
  %v190 = vshrl.u32 %v189, 7
  %v191 = vsub.s32 6, %v190
  %v192 = vrot.slane %v71, %v191
  %v195 = vlaneseq
  %v196 = vshrl.u32 %v195, 7
  %v197 = vsub.s32 2, %v196
  %v198 = vrot.slane %v188, %v197
  %v199 = vlaneseq
  %v200 = vshrl.u32 %v199, 7
  %v201 = vsub.s32 2, %v200
  %v202 = vrot.slane %v192, %v201
  %v203 = vmul.f32 %v171, %v198
  %v204 = vmul.f32 %v171, %v202
  %v205 = vmul.f32 %v175, %v198
  %v206 = vmul.f32 %v175, %v202
  %v207 = vmul.f32 %v179, %v198
  %v208 = vmul.f32 %v179, %v202
  %v209 = vmul.f32 %v183, %v198
  %v210 = vmul.f32 %v183, %v202
  %v211 = vadd.f32 %v161, %v203
  %v212 = vadd.f32 %v162, %v204
  %v213 = vadd.f32 %v163, %v205
  %v214 = vadd.f32 %v164, %v206
  %v215 = vadd.f32 %v165, %v207
  %v216 = vadd.f32 %v166, %v208
  %v217 = vadd.f32 %v167, %v209
  %v218 = vadd.f32 %v168, %v210
  %219 = vset.pattern.permute.xlu0 3
  %220 = vperm.xlu0 %219, %v14
  %v221 = vpop.permute.xlu0 %220
  %223 = vset.pattern.permute.xlu0 3
  %224 = vperm.xlu0 %223, %v15
  %v225 = vpop.permute.xlu0 %224
  %227 = vset.pattern.permute.xlu0 3
  %228 = vperm.xlu0 %227, %v16
  %v229 = vpop.permute.xlu0 %228
  %231 = vset.pattern.permute.xlu0 3
  %232 = vperm.xlu0 %231, %v17
  %v233 = vpop.permute.xlu0 %232
  %v235 = vlaneseq
  %v236 = vshrl.u32 %v235, 7
  %v237 = vsub.s32 3, %v236
  %v238 = vrot.slane %v71, %v237
  %v239 = vlaneseq
  %v240 = vshrl.u32 %v239, 7
  %v241 = vsub.s32 7, %v240
  %v242 = vrot.slane %v71, %v241
  %v245 = vlaneseq
  %v246 = vshrl.u32 %v245, 7
  %v247 = vsub.s32 3, %v246
  %v248 = vrot.slane %v238, %v247
  %v249 = vlaneseq
  %v250 = vshrl.u32 %v249, 7
  %v251 = vsub.s32 3, %v250
  %v252 = vrot.slane %v242, %v251
  %v253 = vmul.f32 %v221, %v248
  %v254 = vmul.f32 %v221, %v252
  %v255 = vmul.f32 %v225, %v248
  %v256 = vmul.f32 %v225, %v252
  %v257 = vmul.f32 %v229, %v248
  %v258 = vmul.f32 %v229, %v252
  %v259 = vmul.f32 %v233, %v248
  %v260 = vmul.f32 %v233, %v252
  %v261 = vadd.f32 %v211, %v253
  %v262 = vadd.f32 %v212, %v254
  %v263 = vadd.f32 %v213, %v255
  %v264 = vadd.f32 %v214, %v256
  %v265 = vadd.f32 %v215, %v257
  %v266 = vadd.f32 %v216, %v258
  %v267 = vadd.f32 %v217, %v259
  %v268 = vadd.f32 %v218, %v260
  %v269 = vmax.f32 %v261, 0.0
  %v270 = vmax.f32 %v262, 0.0
  %v271 = vmax.f32 %v263, 0.0
  %v272 = vmax.f32 %v264, 0.0
  %v273 = vmax.f32 %v265, 0.0
  %v274 = vmax.f32 %v266, 0.0
  %v275 = vmax.f32 %v267, 0.0
  %v276 = vmax.f32 %v268, 0.0
  %vm277 = vcmask 261120
  %v279 = vsel %vm277, %v18, 0
  %v282 = vsel %vm277, %v19, 0
  %v285 = vsel %vm277, %v20, 0
  %v288 = vsel %vm277, %v21, 0
  %v291 = vsel %vm277, %v22, 0
  %v294 = vsel %vm277, %v23, 0
  %v297 = vsel %vm277, %v24, 0
  %v300 = vsel %vm277, %v25, 0
  %v303 = vsel %vm277, %v26, 0
  %305 = vmatprep.subr.mxu0 0.0
  %306 = vmatpush1.msra.mxu0 0.0
  %307 = vmatprep.subr.mxu0 0.0
  %308 = vmatpush1.msra.mxu0 0.0
  %309 = vmatprep.subr.mxu0 0.0
  %310 = vmatpush1.msra.mxu0 0.0
  %311 = vmatprep.subr.mxu0 0.0
  %312 = vmatpush1.msra.mxu0 0.0
  %313 = vmatprep.subr.mxu0 0.0
  %314 = vmatpush1.msra.mxu0 0.0
  %315 = vmatprep.subr.mxu0 0.0
  %316 = vmatpush1.msra.mxu0 0.0
  %317 = vmatprep.subr.mxu0 0.0
  %318 = vmatpush1.msra.mxu0 0.0
  %319 = vmatprep.subr.mxu0 0.0
  %320 = vmatpush1.msra.mxu0 0.0
  %321 = vmatprep.subr.mxu0 0.0
  %322 = vmatpush1.msra.mxu0 0.0
  %323 = vmatprep.subr.mxu0 0.0
  %324 = vmatpush1.msra.mxu0 0.0
  %325 = vmatprep.subr.mxu0 0.0
  %326 = vmatpush1.msra.mxu0 0.0
  %327 = vmatprep.subr.mxu0 0.0
  %328 = vmatpush1.msra.mxu0 0.0
  %329 = vmatprep.subr.mxu0 %v276
  %330 = vmatpush1.msra.mxu0 %v275
  %331 = vmatprep.subr.mxu0 %v274
  %332 = vmatpush1.msra.mxu0 %v273
  %333 = vmatprep.subr.mxu0 %v272
  %334 = vmatpush1.msra.mxu0 %v271
  %335 = vmatprep.subr.mxu0 %v270
  %336 = vmatpush1.msra.mxu0 %v269
  %337 = vmatprep.subr.mxu0 0.0
  %338 = vmatpush2.msra.mxu0 0.0
  %339 = vmatprep.subr.mxu0 0.0
  %340 = vmatpush2.msra.mxu0 0.0
  %341 = vmatprep.subr.mxu0 0.0
  %342 = vmatpush2.msra.mxu0 0.0
  %343 = vmatprep.subr.mxu0 0.0
  %344 = vmatpush2.msra.mxu0 0.0
  %345 = vmatprep.subr.mxu0 0.0
  %346 = vmatpush2.msra.mxu0 0.0
  %347 = vmatprep.subr.mxu0 0.0
  %348 = vmatpush2.msra.mxu0 0.0
  %349 = vmatprep.subr.mxu0 0.0
  %350 = vmatpush2.msra.mxu0 0.0
  %351 = vmatprep.subr.mxu0 0.0
  %352 = vmatpush2.msra.mxu0 0.0
  %353 = vmatprep.subr.mxu0 0.0
  %354 = vmatpush2.msra.mxu0 0.0
  %355 = vmatprep.subr.mxu0 0.0
  %356 = vmatpush2.msra.mxu0 0.0
  %357 = vmatprep.subr.mxu0 0.0
  %358 = vmatpush2.msra.mxu0 0.0
  %359 = vmatprep.subr.mxu0 0.0
  %360 = vmatpush2.msra.mxu0 0.0
  %361 = vmatprep.subr.mxu0 0.0
  %362 = vmatpush2.msra.mxu0 0.0
  %363 = vmatprep.subr.mxu0 0.0
  %364 = vmatpush2.msra.mxu0 0.0
  %365 = vmatprep.subr.mxu0 0.0
  %366 = vmatpush2.msra.mxu0 0.0
  %367 = vmatprep.subr.mxu0 0.0
  %368 = vmatpush2.msra.mxu0 0.0
  %369 = vmatprep.mubr.f32.mxu0 0.0
  %370 = vmatmul.mubr.f32.gmra.mxu0 %v279
  %v371 = vpop.f32.mrf.mxu0
  %v372 = vadd.f32 0.0, %v371
  %v373 = vpop.f32.mrf.mxu0
  %v374 = vadd.f32 0.0, %v373
  %375 = vmatprep.mubr.f32.mxu0 0.0
  %376 = vmatmul.mubr.f32.gmra.mxu0 %v282
  %v377 = vpop.f32.mrf.mxu0
  %v378 = vadd.f32 0.0, %v377
  %v379 = vpop.f32.mrf.mxu0
  %v380 = vadd.f32 0.0, %v379
  %381 = vmatprep.mubr.f32.mxu0 0.0
  %382 = vmatmul.mubr.f32.gmra.mxu0 %v285
  %v383 = vpop.f32.mrf.mxu0
  %v384 = vadd.f32 0.0, %v383
  %v385 = vpop.f32.mrf.mxu0
  %v386 = vadd.f32 0.0, %v385
  %387 = vmatprep.mubr.f32.mxu0 0.0
  %388 = vmatmul.mubr.f32.gmra.mxu0 %v288
  %v389 = vpop.f32.mrf.mxu0
  %v390 = vadd.f32 0.0, %v389
  %v391 = vpop.f32.mrf.mxu0
  %v392 = vadd.f32 0.0, %v391
  %393 = vmatprep.mubr.f32.mxu0 0.0
  %394 = vmatmul.mubr.f32.gmra.mxu0 %v291
  %v395 = vpop.f32.mrf.mxu0
  %v396 = vadd.f32 0.0, %v395
  %v397 = vpop.f32.mrf.mxu0
  %v398 = vadd.f32 0.0, %v397
  %399 = vmatprep.mubr.f32.mxu0 0.0
  %400 = vmatmul.mubr.f32.gmra.mxu0 %v294
  %v401 = vpop.f32.mrf.mxu0
  %v402 = vadd.f32 0.0, %v401
  %v403 = vpop.f32.mrf.mxu0
  %v404 = vadd.f32 0.0, %v403
  %405 = vmatprep.mubr.f32.mxu0 0.0
  %406 = vmatmul.mubr.f32.gmra.mxu0 %v297
  %v407 = vpop.f32.mrf.mxu0
  %v408 = vadd.f32 0.0, %v407
  %v409 = vpop.f32.mrf.mxu0
  %v410 = vadd.f32 0.0, %v409
  %411 = vmatprep.mubr.f32.mxu0 0.0
  %412 = vmatmul.mubr.f32.gmra.mxu0 %v300
  %v413 = vpop.f32.mrf.mxu0
  %v414 = vadd.f32 0.0, %v413
  %v415 = vpop.f32.mrf.mxu0
  %v416 = vadd.f32 0.0, %v415
  %417 = vmatprep.mubr.f32.mxu0 0.0
  %418 = vmatmul.mubr.f32.gmra.mxu0 %v303
  %v419 = vpop.f32.mrf.mxu0
  %v420 = vadd.f32 0.0, %v419
  %v421 = vpop.f32.mrf.mxu0
  %v422 = vadd.f32 0.0, %v421
  %423 = vdwg.mxu0
  %425 = vrot.lane.b32.xlu0 %v374, 17
  %v426 = vpop.permute.xlu0 %425
  %429 = vrot.lane.b32.xlu0 %v372, 17
  %v430 = vpop.permute.xlu0 %429
  %vm431 = vcmask 138240
  %v432 = vsel %vm431, %v430, %v426
  %v435 = vsel %vm431, %v426, %v430
  %v436 = vsel %vm58, 1, 0
  %v437 = vsel %vm59, 1, 0
  %vm438 = vcmp.eq.s32.totalorder %v436, 1
  %vm439 = vcmp.eq.s32.totalorder %v437, 1
  %v440 = vsel %vm438, %v435, 0.0
  %v441 = vsel %vm439, %v432, 0.0
  %v442 = vadd.f32 %v396, %v440
  %v443 = vadd.f32 %v398, %v441
  %445 = vrot.lane.b32.xlu0 %v380, 16
  %v446 = vpop.permute.xlu0 %445
  %449 = vrot.lane.b32.xlu0 %v378, 16
  %v450 = vpop.permute.xlu0 %449
  %vm451 = vcmask 130048
  %v452 = vsel %vm451, %v450, %v446
  %v455 = vsel %vm451, %v446, %v450
  %v456 = vsel %vm54, 1, 0
  %v457 = vsel %vm55, 1, 0
  %vm458 = vcmp.eq.s32.totalorder %v456, 1
  %vm459 = vcmp.eq.s32.totalorder %v457, 1
  %v460 = vsel %vm458, %v455, 0.0
  %v461 = vsel %vm459, %v452, 0.0
  %v462 = vadd.f32 %v442, %v460
  %v463 = vadd.f32 %v443, %v461
  %465 = vrot.lane.b32.xlu0 %v386, 15
  %v466 = vpop.permute.xlu0 %465
  %469 = vrot.lane.b32.xlu0 %v384, 15
  %v470 = vpop.permute.xlu0 %469
  %vm471 = vcmask 121856
  %v472 = vsel %vm471, %v470, %v466
  %v475 = vsel %vm471, %v466, %v470
  %v476 = vsel %vm62, 1, 0
  %v477 = vsel %vm63, 1, 0
  %vm478 = vcmp.eq.s32.totalorder %v476, 1
  %vm479 = vcmp.eq.s32.totalorder %v477, 1
  %v480 = vsel %vm478, %v475, 0.0
  %v481 = vsel %vm479, %v472, 0.0
  %v482 = vadd.f32 %v462, %v480
  %v483 = vadd.f32 %v463, %v481
  %485 = vrot.lane.b32.xlu0 %v392, 1
  %v486 = vpop.permute.xlu0 %485
  %489 = vrot.lane.b32.xlu0 %v390, 1
  %v490 = vpop.permute.xlu0 %489
  %vm491 = vcmask 7168
  %v492 = vsel %vm491, %v490, %v486
  %v495 = vsel %vm491, %v486, %v490
  %v496 = vsel %vm56, 1, 0
  %v497 = vsel %vm57, 1, 0
  %vm498 = vcmp.eq.s32.totalorder %v496, 1
  %vm499 = vcmp.eq.s32.totalorder %v497, 1
  %v500 = vsel %vm498, %v495, 0.0
  %v501 = vsel %vm499, %v492, 0.0
  %v502 = vadd.f32 %v482, %v500
  %v503 = vadd.f32 %v483, %v501
  %506 = vrot.lane.b32.xlu0 %v402, 127
  %v507 = vpop.permute.xlu0 %506
  %508 = vrot.lane.b32.xlu0 %v404, 127
  %v509 = vpop.permute.xlu0 %508
  %vm510 = vcmask 1039360
  %v511 = vsel %vm510, %v507, %v509
  %v515 = vsel %vm510, %v509, %v507
  %v516 = vsel %vm60, 1, 0
  %v517 = vsel %vm61, 1, 0
  %vm518 = vcmp.eq.s32.totalorder %v516, 1
  %vm519 = vcmp.eq.s32.totalorder %v517, 1
  %v520 = vsel %vm518, %v511, 0.0
  %v521 = vsel %vm519, %v515, 0.0
  %v522 = vadd.f32 %v502, %v520
  %v523 = vadd.f32 %v503, %v521
  %526 = vrot.lane.b32.xlu0 %v408, 113
  %v527 = vpop.permute.xlu0 %526
  %528 = vrot.lane.b32.xlu0 %v410, 113
  %v529 = vpop.permute.xlu0 %528
  %vm530 = vcmask 924672
  %v531 = vsel %vm530, %v527, %v529
  %v535 = vsel %vm530, %v529, %v527
  %v536 = vsel %vm66, 1, 0
  %v537 = vsel %vm67, 1, 0
  %vm538 = vcmp.eq.s32.totalorder %v536, 1
  %vm539 = vcmp.eq.s32.totalorder %v537, 1
  %v540 = vsel %vm538, %v531, 0.0
  %v541 = vsel %vm539, %v535, 0.0
  %v542 = vadd.f32 %v522, %v540
  %v543 = vadd.f32 %v523, %v541
  %546 = vrot.lane.b32.xlu0 %v414, 112
  %v547 = vpop.permute.xlu0 %546
  %548 = vrot.lane.b32.xlu0 %v416, 112
  %v549 = vpop.permute.xlu0 %548
  %vm550 = vcmask 916480
  %v551 = vsel %vm550, %v547, %v549
  %v555 = vsel %vm550, %v549, %v547
  %v556 = vsel %vm64, 1, 0
  %v557 = vsel %vm65, 1, 0
  %vm558 = vcmp.eq.s32.totalorder %v556, 1
  %vm559 = vcmp.eq.s32.totalorder %v557, 1
  %v560 = vsel %vm558, %v551, 0.0
  %v561 = vsel %vm559, %v555, 0.0
  %v562 = vadd.f32 %v542, %v560
  %v563 = vadd.f32 %v543, %v561
  %566 = vrot.lane.b32.xlu0 %v420, 111
  %v567 = vpop.permute.xlu0 %566
  %568 = vrot.lane.b32.xlu0 %v422, 111
  %v569 = vpop.permute.xlu0 %568
  %vm570 = vcmask 908288
  %v571 = vsel %vm570, %v567, %v569
  %v575 = vsel %vm570, %v569, %v567
  %v576 = vsel %vm68, 1, 0
  %v577 = vsel %vm69, 1, 0
  %vm578 = vcmp.eq.s32.totalorder %v576, 1
  %vm579 = vcmp.eq.s32.totalorder %v577, 1
  %v580 = vsel %vm578, %v571, 0.0
  %v581 = vsel %vm579, %v575, 0.0
  %v582 = vadd.f32 %v562, %v580
  %v583 = vadd.f32 %v563, %v581
  %584 = vst [vmem:[%s3] sm:$0xff] %v582
  %585 = vst [vmem:[%s3 + $0x8] sm:$0xff] %v583
  %v587 = vcombine.high %v70, %v70
  %589 = vst [vmem:[%s3 + $0x10] sm:$0xf] %v70
  %590 = vst [vmem:[%s3 + $0x18] sm:$0xf] %v587
  %s591 = scalar_lea.vmem %s0, 8
  %v592 = vld [vmem:[%s591] sm:$0xff]
  %v593 = vmax.f32 %v592, 0.0
  %v595 = vlaneseq
  %v596 = vshrl.u32 %v595, 7
  %v597 = vsub.s32 0, %v596
  %v598 = vrot.slane %v593, %v597
  %v599 = vlaneseq
  %v600 = vshrl.u32 %v599, 7
  %v601 = vsub.s32 4, %v600
  %v602 = vrot.slane %v593, %v601
  %v605 = vlaneseq
  %v606 = vshrl.u32 %v605, 7
  %v607 = vsub.s32 0, %v606
  %v608 = vrot.slane %v598, %v607
  %v609 = vlaneseq
  %v610 = vshrl.u32 %v609, 7
  %v611 = vsub.s32 0, %v610
  %v612 = vrot.slane %v602, %v611
  %v613 = vmul.f32 %v75, %v608
  %v614 = vmul.f32 %v75, %v612
  %v615 = vmul.f32 %v80, %v608
  %v616 = vmul.f32 %v80, %v612
  %v617 = vmul.f32 %v85, %v608
  %v618 = vmul.f32 %v85, %v612
  %v619 = vmul.f32 %v90, %v608
  %v620 = vmul.f32 %v90, %v612
  %v621 = vlaneseq
  %v622 = vshrl.u32 %v621, 7
  %v623 = vsub.s32 1, %v622
  %v624 = vrot.slane %v593, %v623
  %v625 = vlaneseq
  %v626 = vshrl.u32 %v625, 7
  %v627 = vsub.s32 5, %v626
  %v628 = vrot.slane %v593, %v627
  %v631 = vlaneseq
  %v632 = vshrl.u32 %v631, 7
  %v633 = vsub.s32 1, %v632
  %v634 = vrot.slane %v624, %v633
  %v635 = vlaneseq
  %v636 = vshrl.u32 %v635, 7
  %v637 = vsub.s32 1, %v636
  %v638 = vrot.slane %v628, %v637
  %v639 = vmul.f32 %v121, %v634
  %v640 = vmul.f32 %v121, %v638
  %v641 = vmul.f32 %v125, %v634
  %v642 = vmul.f32 %v125, %v638
  %v643 = vmul.f32 %v129, %v634
  %v644 = vmul.f32 %v129, %v638
  %v645 = vmul.f32 %v133, %v634
  %v646 = vmul.f32 %v133, %v638
  %v647 = vadd.f32 %v613, %v639
  %v648 = vadd.f32 %v614, %v640
  %v649 = vadd.f32 %v615, %v641
  %v650 = vadd.f32 %v616, %v642
  %v651 = vadd.f32 %v617, %v643
  %v652 = vadd.f32 %v618, %v644
  %v653 = vadd.f32 %v619, %v645
  %v654 = vadd.f32 %v620, %v646
  %v655 = vlaneseq
  %v656 = vshrl.u32 %v655, 7
  %v657 = vsub.s32 2, %v656
  %v658 = vrot.slane %v593, %v657
  %v659 = vlaneseq
  %v660 = vshrl.u32 %v659, 7
  %v661 = vsub.s32 6, %v660
  %v662 = vrot.slane %v593, %v661
  %v665 = vlaneseq
  %v666 = vshrl.u32 %v665, 7
  %v667 = vsub.s32 2, %v666
  %v668 = vrot.slane %v658, %v667
  %v669 = vlaneseq
  %v670 = vshrl.u32 %v669, 7
  %v671 = vsub.s32 2, %v670
  %v672 = vrot.slane %v662, %v671
  %v673 = vmul.f32 %v171, %v668
  %v674 = vmul.f32 %v171, %v672
  %v675 = vmul.f32 %v175, %v668
  %v676 = vmul.f32 %v175, %v672
  %v677 = vmul.f32 %v179, %v668
  %v678 = vmul.f32 %v179, %v672
  %v679 = vmul.f32 %v183, %v668
  %v680 = vmul.f32 %v183, %v672
  %v681 = vadd.f32 %v647, %v673
  %v682 = vadd.f32 %v648, %v674
  %v683 = vadd.f32 %v649, %v675
  %v684 = vadd.f32 %v650, %v676
  %v685 = vadd.f32 %v651, %v677
  %v686 = vadd.f32 %v652, %v678
  %v687 = vadd.f32 %v653, %v679
  %v688 = vadd.f32 %v654, %v680
  %v689 = vlaneseq
  %v690 = vshrl.u32 %v689, 7
  %v691 = vsub.s32 3, %v690
  %v692 = vrot.slane %v593, %v691
  %v693 = vlaneseq
  %v694 = vshrl.u32 %v693, 7
  %v695 = vsub.s32 7, %v694
  %v696 = vrot.slane %v593, %v695
  %v699 = vlaneseq
  %v700 = vshrl.u32 %v699, 7
  %v701 = vsub.s32 3, %v700
  %v702 = vrot.slane %v692, %v701
  %v703 = vlaneseq
  %v704 = vshrl.u32 %v703, 7
  %v705 = vsub.s32 3, %v704
  %v706 = vrot.slane %v696, %v705
  %v707 = vmul.f32 %v221, %v702
  %v708 = vmul.f32 %v221, %v706
  %v709 = vmul.f32 %v225, %v702
  %v710 = vmul.f32 %v225, %v706
  %v711 = vmul.f32 %v229, %v702
  %v712 = vmul.f32 %v229, %v706
  %v713 = vmul.f32 %v233, %v702
  %v714 = vmul.f32 %v233, %v706
  %v715 = vadd.f32 %v681, %v707
  %v716 = vadd.f32 %v682, %v708
  %v717 = vadd.f32 %v683, %v709
  %v718 = vadd.f32 %v684, %v710
  %v719 = vadd.f32 %v685, %v711
  %v720 = vadd.f32 %v686, %v712
  %v721 = vadd.f32 %v687, %v713
  %v722 = vadd.f32 %v688, %v714
  %v723 = vmax.f32 %v715, 0.0
  %v724 = vmax.f32 %v716, 0.0
  %v725 = vmax.f32 %v717, 0.0
  %v726 = vmax.f32 %v718, 0.0
  %v727 = vmax.f32 %v719, 0.0
  %v728 = vmax.f32 %v720, 0.0
  %v729 = vmax.f32 %v721, 0.0
  %v730 = vmax.f32 %v722, 0.0
  %731 = vmatprep.subr.mxu0 0.0
  %732 = vmatpush1.msra.mxu0 0.0
  %733 = vmatprep.subr.mxu0 0.0
  %734 = vmatpush1.msra.mxu0 0.0
  %735 = vmatprep.subr.mxu0 0.0
  %736 = vmatpush1.msra.mxu0 0.0
  %737 = vmatprep.subr.mxu0 0.0
  %738 = vmatpush1.msra.mxu0 0.0
  %739 = vmatprep.subr.mxu0 0.0
  %740 = vmatpush1.msra.mxu0 0.0
  %741 = vmatprep.subr.mxu0 0.0
  %742 = vmatpush1.msra.mxu0 0.0
  %743 = vmatprep.subr.mxu0 0.0
  %744 = vmatpush1.msra.mxu0 0.0
  %745 = vmatprep.subr.mxu0 0.0
  %746 = vmatpush1.msra.mxu0 0.0
  %747 = vmatprep.subr.mxu0 0.0
  %748 = vmatpush1.msra.mxu0 0.0
  %749 = vmatprep.subr.mxu0 0.0
  %750 = vmatpush1.msra.mxu0 0.0
  %751 = vmatprep.subr.mxu0 0.0
  %752 = vmatpush1.msra.mxu0 0.0
  %753 = vmatprep.subr.mxu0 0.0
  %754 = vmatpush1.msra.mxu0 0.0
  %755 = vmatprep.subr.mxu0 %v730
  %756 = vmatpush1.msra.mxu0 %v729
  %757 = vmatprep.subr.mxu0 %v728
  %758 = vmatpush1.msra.mxu0 %v727
  %759 = vmatprep.subr.mxu0 %v726
  %760 = vmatpush1.msra.mxu0 %v725
  %761 = vmatprep.subr.mxu0 %v724
  %762 = vmatpush1.msra.mxu0 %v723
  %763 = vmatprep.subr.mxu0 0.0
  %764 = vmatpush2.msra.mxu0 0.0
  %765 = vmatprep.subr.mxu0 0.0
  %766 = vmatpush2.msra.mxu0 0.0
  %767 = vmatprep.subr.mxu0 0.0
  %768 = vmatpush2.msra.mxu0 0.0
  %769 = vmatprep.subr.mxu0 0.0
  %770 = vmatpush2.msra.mxu0 0.0
  %771 = vmatprep.subr.mxu0 0.0
  %772 = vmatpush2.msra.mxu0 0.0
  %773 = vmatprep.subr.mxu0 0.0
  %774 = vmatpush2.msra.mxu0 0.0
  %775 = vmatprep.subr.mxu0 0.0
  %776 = vmatpush2.msra.mxu0 0.0
  %777 = vmatprep.subr.mxu0 0.0
  %778 = vmatpush2.msra.mxu0 0.0
  %779 = vmatprep.subr.mxu0 0.0
  %780 = vmatpush2.msra.mxu0 0.0
  %781 = vmatprep.subr.mxu0 0.0
  %782 = vmatpush2.msra.mxu0 0.0
  %783 = vmatprep.subr.mxu0 0.0
  %784 = vmatpush2.msra.mxu0 0.0
  %785 = vmatprep.subr.mxu0 0.0
  %786 = vmatpush2.msra.mxu0 0.0
  %787 = vmatprep.subr.mxu0 0.0
  %788 = vmatpush2.msra.mxu0 0.0
  %789 = vmatprep.subr.mxu0 0.0
  %790 = vmatpush2.msra.mxu0 0.0
  %791 = vmatprep.subr.mxu0 0.0
  %792 = vmatpush2.msra.mxu0 0.0
  %793 = vmatprep.subr.mxu0 0.0
  %794 = vmatpush2.msra.mxu0 0.0
  %795 = vmatprep.mubr.f32.mxu0 0.0
  %796 = vmatmul.mubr.f32.gmra.mxu0 %v279
  %v797 = vpop.f32.mrf.mxu0
  %v798 = vadd.f32 0.0, %v797
  %v799 = vpop.f32.mrf.mxu0
  %v800 = vadd.f32 0.0, %v799
  %801 = vmatprep.mubr.f32.mxu0 0.0
  %802 = vmatmul.mubr.f32.gmra.mxu0 %v282
  %v803 = vpop.f32.mrf.mxu0
  %v804 = vadd.f32 0.0, %v803
  %v805 = vpop.f32.mrf.mxu0
  %v806 = vadd.f32 0.0, %v805
  %807 = vmatprep.mubr.f32.mxu0 0.0
  %808 = vmatmul.mubr.f32.gmra.mxu0 %v285
  %v809 = vpop.f32.mrf.mxu0
  %v810 = vadd.f32 0.0, %v809
  %v811 = vpop.f32.mrf.mxu0
  %v812 = vadd.f32 0.0, %v811
  %813 = vmatprep.mubr.f32.mxu0 0.0
  %814 = vmatmul.mubr.f32.gmra.mxu0 %v288
  %v815 = vpop.f32.mrf.mxu0
  %v816 = vadd.f32 0.0, %v815
  %v817 = vpop.f32.mrf.mxu0
  %v818 = vadd.f32 0.0, %v817
  %819 = vmatprep.mubr.f32.mxu0 0.0
  %820 = vmatmul.mubr.f32.gmra.mxu0 %v291
  %v821 = vpop.f32.mrf.mxu0
  %v822 = vadd.f32 0.0, %v821
  %v823 = vpop.f32.mrf.mxu0
  %v824 = vadd.f32 0.0, %v823
  %825 = vmatprep.mubr.f32.mxu0 0.0
  %826 = vmatmul.mubr.f32.gmra.mxu0 %v294
  %v827 = vpop.f32.mrf.mxu0
  %v828 = vadd.f32 0.0, %v827
  %v829 = vpop.f32.mrf.mxu0
  %v830 = vadd.f32 0.0, %v829
  %831 = vmatprep.mubr.f32.mxu0 0.0
  %832 = vmatmul.mubr.f32.gmra.mxu0 %v297
  %v833 = vpop.f32.mrf.mxu0
  %v834 = vadd.f32 0.0, %v833
  %v835 = vpop.f32.mrf.mxu0
  %v836 = vadd.f32 0.0, %v835
  %837 = vmatprep.mubr.f32.mxu0 0.0
  %838 = vmatmul.mubr.f32.gmra.mxu0 %v300
  %v839 = vpop.f32.mrf.mxu0
  %v840 = vadd.f32 0.0, %v839
  %v841 = vpop.f32.mrf.mxu0
  %v842 = vadd.f32 0.0, %v841
  %843 = vmatprep.mubr.f32.mxu0 0.0
  %844 = vmatmul.mubr.f32.gmra.mxu0 %v303
  %v845 = vpop.f32.mrf.mxu0
  %v846 = vadd.f32 0.0, %v845
  %v847 = vpop.f32.mrf.mxu0
  %v848 = vadd.f32 0.0, %v847
  %849 = vdwg.mxu0
  %851 = vrot.lane.b32.xlu0 %v800, 17
  %v852 = vpop.permute.xlu0 %851
  %855 = vrot.lane.b32.xlu0 %v798, 17
  %v856 = vpop.permute.xlu0 %855
  %v857 = vsel %vm431, %v856, %v852
  %v860 = vsel %vm431, %v852, %v856
  %v861 = vsel %vm438, %v860, 0.0
  %v862 = vsel %vm439, %v857, 0.0
  %v863 = vadd.f32 %v822, %v861
  %v864 = vadd.f32 %v824, %v862
  %866 = vrot.lane.b32.xlu0 %v806, 16
  %v867 = vpop.permute.xlu0 %866
  %870 = vrot.lane.b32.xlu0 %v804, 16
  %v871 = vpop.permute.xlu0 %870
  %v872 = vsel %vm451, %v871, %v867
  %v875 = vsel %vm451, %v867, %v871
  %v876 = vsel %vm458, %v875, 0.0
  %v877 = vsel %vm459, %v872, 0.0
  %v878 = vadd.f32 %v863, %v876
  %v879 = vadd.f32 %v864, %v877
  %881 = vrot.lane.b32.xlu0 %v812, 15
  %v882 = vpop.permute.xlu0 %881
  %885 = vrot.lane.b32.xlu0 %v810, 15
  %v886 = vpop.permute.xlu0 %885
  %v887 = vsel %vm471, %v886, %v882
  %v890 = vsel %vm471, %v882, %v886
  %v891 = vsel %vm478, %v890, 0.0
  %v892 = vsel %vm479, %v887, 0.0
  %v893 = vadd.f32 %v878, %v891
  %v894 = vadd.f32 %v879, %v892
  %896 = vrot.lane.b32.xlu0 %v818, 1
  %v897 = vpop.permute.xlu0 %896
  %900 = vrot.lane.b32.xlu0 %v816, 1
  %v901 = vpop.permute.xlu0 %900
  %v902 = vsel %vm491, %v901, %v897
  %v905 = vsel %vm491, %v897, %v901
  %v906 = vsel %vm498, %v905, 0.0
  %v907 = vsel %vm499, %v902, 0.0
  %v908 = vadd.f32 %v893, %v906
  %v909 = vadd.f32 %v894, %v907
  %912 = vrot.lane.b32.xlu0 %v828, 127
  %v913 = vpop.permute.xlu0 %912
  %914 = vrot.lane.b32.xlu0 %v830, 127
  %v915 = vpop.permute.xlu0 %914
  %v916 = vsel %vm510, %v913, %v915
  %v920 = vsel %vm510, %v915, %v913
  %v921 = vsel %vm518, %v916, 0.0
  %v922 = vsel %vm519, %v920, 0.0
  %v923 = vadd.f32 %v908, %v921
  %v924 = vadd.f32 %v909, %v922
  %927 = vrot.lane.b32.xlu0 %v834, 113
  %v928 = vpop.permute.xlu0 %927
  %929 = vrot.lane.b32.xlu0 %v836, 113
  %v930 = vpop.permute.xlu0 %929
  %v931 = vsel %vm530, %v928, %v930
  %v935 = vsel %vm530, %v930, %v928
  %v936 = vsel %vm538, %v931, 0.0
  %v937 = vsel %vm539, %v935, 0.0
  %v938 = vadd.f32 %v923, %v936
  %v939 = vadd.f32 %v924, %v937
  %942 = vrot.lane.b32.xlu0 %v840, 112
  %v943 = vpop.permute.xlu0 %942
  %944 = vrot.lane.b32.xlu0 %v842, 112
  %v945 = vpop.permute.xlu0 %944
  %v946 = vsel %vm550, %v943, %v945
  %v950 = vsel %vm550, %v945, %v943
  %v951 = vsel %vm558, %v946, 0.0
  %v952 = vsel %vm559, %v950, 0.0
  %v953 = vadd.f32 %v938, %v951
  %v954 = vadd.f32 %v939, %v952
  %957 = vrot.lane.b32.xlu0 %v846, 111
  %v958 = vpop.permute.xlu0 %957
  %959 = vrot.lane.b32.xlu0 %v848, 111
  %v960 = vpop.permute.xlu0 %959
  %v961 = vsel %vm570, %v958, %v960
  %v965 = vsel %vm570, %v960, %v958
  %v966 = vsel %vm578, %v961, 0.0
  %v967 = vsel %vm579, %v965, 0.0
  %v968 = vadd.f32 %v953, %v966
  %v969 = vadd.f32 %v954, %v967
  %s970 = scalar_lea.vmem %s3, 32
  %971 = vst [vmem:[%s970] sm:$0xff] %v968
  %972 = vst [vmem:[%s970 + $0x8] sm:$0xff] %v969
  %v974 = vcombine.high %v592, %v592
  %976 = vst [vmem:[%s970 + $0x10] sm:$0xf] %v592
  %977 = vst [vmem:[%s970 + $0x18] sm:$0xf] %v974
  // Predicated region
  $region14: #{bottleneck_forward.1} parent=0 // pred_check
    _
  $region15: #{bottleneck_forward.1} parent=0 // pred_check_branch
    %979 = sbr.rel (0) target = $region17
  $region16: #{bottleneck_forward.1} parent=0 // pred_region
    _
  $region17: #{bottleneck_forward.1} parent=0 // pred_fallthru
    _
  // Predicated region
  $region18: #{bottleneck_forward.1} parent=0 // pred_check
    _
  $region19: #{bottleneck_forward.1} parent=0 // pred_check_branch
    %981 = sbr.rel (0) target = $region21
  $region20: #{bottleneck_forward.1} parent=0 // pred_region
    _
  $region21: #{bottleneck_forward.1} parent=0 // pred_fallthru
    _

</llo_original>
